<compile_context>
chip_gen: v7x
topology: tpu7x:2x2x1
jax: 0.10.0
libtpu: 0.0.40
codegen_flags: <defaults>
</compile_context>

<pallas_src>
import functools

import jax
import jax.numpy as jnp
from jax.experimental import pallas as pl
from jax.experimental.pallas import tpu as pltpu


def _round_up(x, m):
    return (x + m - 1) // m * m


def _conditional_kernel(x_ref, m_ref, weff_sm, wcm_sm, beff_sm, o_ref):
    """out[o, :] = b_eff[b, o] + sum_i W_eff[b, o, i] * x[i, :]
                              + sum_j (10 * W_cm^T)[o, j] * m[j, :]

    Channels sit on the sublane axis, pixels are lane-dense on the last axis,
    so every load/store is full lane width.  With C <= 8 the channel mixing is
    a handful of scalar-broadcast FMAs (VPU); weights stay f32 in SMEM and the
    accumulator is f32, so results track the f32 reference to ~ulp level.
    """
    b = pl.program_id(0)                       # batch index
    c_out = o_ref.shape[0]
    c_in = x_ref.shape[0]
    c_m = m_ref.shape[0]

    x = x_ref[...].astype(jnp.float32)         # (C_in, TP)
    m = m_ref[...].astype(jnp.float32)         # (C_m,  TP)

    for o in range(c_out):
        acc = beff_sm[b, o] + weff_sm[b, o * c_in] * x[0:1, :]
        for i in range(1, c_in):
            acc = acc + weff_sm[b, o * c_in + i] * x[i:i + 1, :]
        for j in range(c_m):
            acc = acc + wcm_sm[o * c_m + j] * m[j:j + 1, :]
        o_ref[o:o + 1, :] = acc.astype(o_ref.dtype)


@functools.partial(jax.jit, static_argnames=("pixel_tile", "out_dtype"))
def conditional_forward(X, t, maps, params, *, pixel_tile=16384, out_dtype=None):
    """X: (N, C, H, W) f32/bf16 ; t: (N,) int ; maps: (N, Cm, H, W) f32/bf16.

    Returns (N, C, H, W) in `out_dtype` (default: X.dtype, so bf16 activations
    get bf16 writeback).  Native NCHW, no padding, no extra HBM passes.
    """
    N, C, H, W = X.shape
    Cm = maps.shape[1]
    HW = H * W
    out_dtype = X.dtype if out_dtype is None else out_dtype

    # Pixel tiling: lane-dense (multiple of 128); ragged tail handled by the
    # Pallas pipeline (masked boundary block), NOT by padding the arrays.
    tp = min(_round_up(int(pixel_tile), 128), _round_up(HW, 128))
    grid_p = pl.cdiv(HW, tp)
    # v7x has 2 TensorCores sharding "parallel" grid axes: keep >= 2 steps.
    if N * grid_p < 2 and HW > 128:
        tp = _round_up(pl.cdiv(HW, 2), 128)
        grid_p = pl.cdiv(HW, tp)
    # VMEM per step (double-buffered) ~ 2*(C+Cm)*tp*in_bytes + 2*C*tp*out_bytes:
    # tens of KiB here — far under even v7x's 64 MiB, so no vmem_limit override.

    x = X.reshape(N, C, HW)          # free reshapes, no layout transposes
    m = maps.reshape(N, Cm, HW)

    # ---- Hoisted, per-batch effective weights (tiny; plain JAX) -------------
    f32 = jnp.float32
    inv_s = (1.0 / params["sigmas"].astype(f32))[t.astype(jnp.int32)]   # (N,)
    wb_t = params["W_base"].astype(f32).T          # (C, C)   [out, in]
    wcx_t = params["W_cond_x"].astype(f32).T       # (C, C)
    wcm_t = params["W_cond_m"].astype(f32).T       # (C, Cm)
    bb = params["b_base"].astype(f32).reshape(C)
    bc = params["b_cond"].astype(f32).reshape(C)

    w_eff = inv_s[:, None, None] * wb_t[None] + 10.0 * wcx_t[None]      # (N, C, C)
    b_eff = inv_s[:, None] * bb[None] + 10.0 * bc[None]                 # (N, C)
    wcm10 = 10.0 * wcm_t                                                # (C, Cm)

    w_eff_flat = w_eff.reshape(N, C * C)      # SMEM-friendly 2-D (minimal padding)
    wcm10_flat = wcm10.reshape(C * Cm)        # SMEM-friendly 1-D

    smem = pl.BlockSpec(memory_space=pltpu.MemorySpace.SMEM)

    out = pl.pallas_call(
        _conditional_kernel,
        out_shape=jax.ShapeDtypeStruct((N, C, HW), out_dtype),
        grid=(N, grid_p),
        in_specs=[
            pl.BlockSpec((None, C, tp), lambda b, p: (b, 0, p)),    # X tile
            pl.BlockSpec((None, Cm, tp), lambda b, p: (b, 0, p)),   # maps tile
            smem,                                                    # W_eff   (N, C*C)
            smem,                                                    # 10*Wcm^T (C*Cm,)
            smem,                                                    # b_eff   (N, C)
        ],
        out_specs=pl.BlockSpec((None, C, tp), lambda b, p: (b, 0, p)),
        compiler_params=pltpu.CompilerParams(
            dimension_semantics=("parallel", "parallel")),
    )(x, m, w_eff_flat, wcm10_flat, b_eff)

    return out.reshape(N, C, H, W)


def reference_forward(X, t, maps, params):
    """Plain-JAX reference mirroring the PyTorch module semantics (NCHW, f32)."""
    hi = jax.lax.Precision.HIGHEST
    Xf = X.astype(jnp.float32)
    Mf = maps.astype(jnp.float32)
    inv_s = (1.0 / params["sigmas"].astype(jnp.float32))[t]
    base = (jnp.einsum("nihw,io->nohw", Xf, params["W_base"], precision=hi)
            + params["b_base"].reshape(1, -1, 1, 1))
    base = base * inv_s[:, None, None, None]
    cond = (jnp.einsum("nihw,io->nohw", Xf, params["W_cond_x"], precision=hi)
            + jnp.einsum("nihw,io->nohw", Mf, params["W_cond_m"], precision=hi)
            + params["b_cond"].reshape(1, -1, 1, 1))
    return base + 10.0 * cond


def init_params(key, C, Cm, n_levels=10):
    k1, k2, k3, k4, k5 = jax.random.split(key, 5)
    sigmas = jnp.exp(jnp.linspace(jnp.log(1.0), jnp.log(0.01), n_levels)
                     ).astype(jnp.float32)
    return {
        "W_base":   0.1 * jax.random.normal(k1, (C, C), jnp.float32),
        "b_base":   0.1 * jax.random.normal(k4, (1, C), jnp.float32),
        "W_cond_x": 0.1 * jax.random.normal(k2, (C, C), jnp.float32),
        "W_cond_m": 0.1 * jax.random.normal(k3, (Cm, C), jnp.float32),
        "b_cond":   0.1 * jax.random.normal(k5, (1, C), jnp.float32),
        "sigmas":   sigmas,
    }


if __name__ == "__main__":
    key = jax.random.PRNGKey(0)
    kx, km, kt, kp, kx2, km2, kt2 = jax.random.split(key, 7)

    # ---- Test A: bf16 activation streaming, bf16 writeback, multi-tile grid.
    N, C, H, W, Cm = 2, 4, 16, 16, 2
    params = init_params(kp, C, Cm)
    X = jax.random.normal(kx, (N, C, H, W), jnp.float32)
    M = jax.random.normal(km, (N, Cm, H, W), jnp.float32)
    t = jax.random.randint(kt, (N,), 0, 10, jnp.int32)
    Xb, Mb = X.astype(jnp.bfloat16), M.astype(jnp.bfloat16)

    out_a = jax.block_until_ready(
        conditional_forward(Xb, t, Mb, params, pixel_tile=128))   # grid (2, 2)
    ref_a = reference_forward(Xb, t, Mb, params)   # same quantized inputs, f32 math
    assert out_a.shape == (N, C, H, W) and out_a.dtype == jnp.bfloat16
    err_a = float(jnp.max(jnp.abs(out_a.astype(jnp.float32) - ref_a)))
    assert jnp.allclose(out_a.astype(jnp.float32), ref_a,
                        atol=5e-2, rtol=1e-2), f"bf16 path max abs err {err_a}"

    # ---- Test B: f32 path with a ragged pixel tail (HW = 153, not a multiple
    #      of 128) — exercises the masked boundary tile with no padding.
    N2, C2, H2, W2, Cm2 = 2, 4, 9, 17, 2
    params2 = init_params(kp, C2, Cm2)
    X2 = jax.random.normal(kx2, (N2, C2, H2, W2), jnp.float32)
    M2 = jax.random.normal(km2, (N2, Cm2, H2, W2), jnp.float32)
    t2 = jax.random.randint(kt2, (N2,), 0, 10, jnp.int32)

    out_b = jax.block_until_ready(
        conditional_forward(X2, t2, M2, params2,
                            pixel_tile=128, out_dtype=jnp.float32))
    ref_b = reference_forward(X2, t2, M2, params2)
    assert out_b.shape == (N2, C2, H2, W2) and out_b.dtype == jnp.float32
    err_b = float(jnp.max(jnp.abs(out_b - ref_b)))
    assert jnp.allclose(out_b, ref_b, atol=1e-3, rtol=1e-3), \
        f"f32 ragged path max abs err {err_b}"

    print("KERNEL_OK")
</pallas_src>

<mosaic_0001>
module attributes {stable_mosaic.version = 11 : i64} {
  func.func @_conditional_kernel(%arg0: i32, %arg1: i32, %arg2: memref<1x4x128xbf16, #tpu.memory_space<vmem>>, %arg3: memref<1x2x128xbf16, #tpu.memory_space<vmem>>, %arg4: memref<2x16xf32, #tpu.memory_space<smem>>, %arg5: memref<8xf32, #tpu.memory_space<smem>>, %arg6: memref<2x4xf32, #tpu.memory_space<smem>>, %arg7: memref<1x4x128xbf16, #tpu.memory_space<vmem>>) attributes {dimension_semantics = [#tpu.dimension_semantics<parallel>, #tpu.dimension_semantics<parallel>], iteration_bounds = array<i64: 2, 2>, scalar_prefetch = 0 : i64, scratch_operands = 0 : i64, tpu.core_type = #tpu.core_type<tc>, window_params = [{transform_indices = @transform_0, window_bounds = array<i64: 1, 4, 128>}, {transform_indices = @transform_1, window_bounds = array<i64: 1, 2, 128>}, {transform_indices = @transform_2, window_bounds = array<i64: 2, 16>}, {transform_indices = @transform_3, window_bounds = array<i64: 8>}, {transform_indices = @transform_4, window_bounds = array<i64: 2, 4>}, {transform_indices = @transform_5, window_bounds = array<i64: 1, 4, 128>}]} {
    %c0 = arith.constant 0 : index
    %c0_0 = arith.constant 0 : index
    %c0_1 = arith.constant 0 : index
    %0 = vector.load %arg2[%c0, %c0_0, %c0_1] : memref<1x4x128xbf16, #tpu.memory_space<vmem>>, vector<1x4x128xbf16>
    %1 = vector.shape_cast %0 : vector<1x4x128xbf16> to vector<4x128xbf16>
    %2 = arith.extf %1 : vector<4x128xbf16> to vector<4x128xf32>
    %c0_2 = arith.constant 0 : index
    %c0_3 = arith.constant 0 : index
    %c0_4 = arith.constant 0 : index
    %3 = vector.load %arg3[%c0_2, %c0_3, %c0_4] : memref<1x2x128xbf16, #tpu.memory_space<vmem>>, vector<1x2x128xbf16>
    %4 = vector.shape_cast %3 : vector<1x2x128xbf16> to vector<2x128xbf16>
    %5 = arith.extf %4 : vector<2x128xbf16> to vector<2x128xf32>
    %6 = arith.index_cast %arg0 : i32 to index
    %c0_5 = arith.constant 0 : index
    %7 = memref.load %arg6[%6, %c0_5] : memref<2x4xf32, #tpu.memory_space<smem>>
    %8 = arith.index_cast %arg0 : i32 to index
    %c0_6 = arith.constant 0 : index
    %9 = memref.load %arg4[%8, %c0_6] : memref<2x16xf32, #tpu.memory_space<smem>>
    %10 = vector.extract_strided_slice %2 {offsets = [0, 0], sizes = [1, 128], strides = [1, 1]} : vector<4x128xf32> to vector<1x128xf32>
    %11 = vector.broadcast %9 : f32 to vector<1x128xf32>
    %12 = arith.mulf %11, %10 : vector<1x128xf32>
    %13 = vector.broadcast %7 : f32 to vector<1x128xf32>
    %14 = arith.addf %13, %12 : vector<1x128xf32>
    %15 = arith.index_cast %arg0 : i32 to index
    %c1 = arith.constant 1 : index
    %16 = memref.load %arg4[%15, %c1] : memref<2x16xf32, #tpu.memory_space<smem>>
    %17 = vector.extract_strided_slice %2 {offsets = [1, 0], sizes = [1, 128], strides = [1, 1]} : vector<4x128xf32> to vector<1x128xf32>
    %18 = vector.broadcast %16 : f32 to vector<1x128xf32>
    %19 = arith.mulf %18, %17 : vector<1x128xf32>
    %20 = arith.addf %14, %19 : vector<1x128xf32>
    %21 = arith.index_cast %arg0 : i32 to index
    %c2 = arith.constant 2 : index
    %22 = memref.load %arg4[%21, %c2] : memref<2x16xf32, #tpu.memory_space<smem>>
    %23 = vector.extract_strided_slice %2 {offsets = [2, 0], sizes = [1, 128], strides = [1, 1]} : vector<4x128xf32> to vector<1x128xf32>
    %24 = vector.broadcast %22 : f32 to vector<1x128xf32>
    %25 = arith.mulf %24, %23 : vector<1x128xf32>
    %26 = arith.addf %20, %25 : vector<1x128xf32>
    %27 = arith.index_cast %arg0 : i32 to index
    %c3 = arith.constant 3 : index
    %28 = memref.load %arg4[%27, %c3] : memref<2x16xf32, #tpu.memory_space<smem>>
    %29 = vector.extract_strided_slice %2 {offsets = [3, 0], sizes = [1, 128], strides = [1, 1]} : vector<4x128xf32> to vector<1x128xf32>
    %30 = vector.broadcast %28 : f32 to vector<1x128xf32>
    %31 = arith.mulf %30, %29 : vector<1x128xf32>
    %32 = arith.addf %26, %31 : vector<1x128xf32>
    %c0_7 = arith.constant 0 : index
    %33 = memref.load %arg5[%c0_7] : memref<8xf32, #tpu.memory_space<smem>>
    %34 = vector.extract_strided_slice %5 {offsets = [0, 0], sizes = [1, 128], strides = [1, 1]} : vector<2x128xf32> to vector<1x128xf32>
    %35 = vector.broadcast %33 : f32 to vector<1x128xf32>
    %36 = arith.mulf %35, %34 : vector<1x128xf32>
    %37 = arith.addf %32, %36 : vector<1x128xf32>
    %c1_8 = arith.constant 1 : index
    %38 = memref.load %arg5[%c1_8] : memref<8xf32, #tpu.memory_space<smem>>
    %39 = vector.extract_strided_slice %5 {offsets = [1, 0], sizes = [1, 128], strides = [1, 1]} : vector<2x128xf32> to vector<1x128xf32>
    %40 = vector.broadcast %38 : f32 to vector<1x128xf32>
    %41 = arith.mulf %40, %39 : vector<1x128xf32>
    %42 = arith.addf %37, %41 : vector<1x128xf32>
    %43 = arith.truncf %42 : vector<1x128xf32> to vector<1x128xbf16>
    %c0_9 = arith.constant 0 : index
    %c0_10 = arith.constant 0 : index
    %c0_11 = arith.constant 0 : index
    %44 = vector.load %arg7[%c0_9, %c0_10, %c0_11] : memref<1x4x128xbf16, #tpu.memory_space<vmem>>, vector<1x1x128xbf16>
    %45 = vector.shape_cast %44 : vector<1x1x128xbf16> to vector<1x128xbf16>
    %46 = vector.shape_cast %43 : vector<1x128xbf16> to vector<1x1x128xbf16>
    tpu.vector_store %arg7[%c0_9, %c0_10, %c0_11], %46 {strides = array<i32>} : memref<1x4x128xbf16, #tpu.memory_space<vmem>>, vector<1x1x128xbf16>,
    %47 = arith.index_cast %arg0 : i32 to index
    %c1_12 = arith.constant 1 : index
    %48 = memref.load %arg6[%47, %c1_12] : memref<2x4xf32, #tpu.memory_space<smem>>
    %49 = arith.index_cast %arg0 : i32 to index
    %c4 = arith.constant 4 : index
    %50 = memref.load %arg4[%49, %c4] : memref<2x16xf32, #tpu.memory_space<smem>>
    %51 = vector.extract_strided_slice %2 {offsets = [0, 0], sizes = [1, 128], strides = [1, 1]} : vector<4x128xf32> to vector<1x128xf32>
    %52 = vector.broadcast %50 : f32 to vector<1x128xf32>
    %53 = arith.mulf %52, %51 : vector<1x128xf32>
    %54 = vector.broadcast %48 : f32 to vector<1x128xf32>
    %55 = arith.addf %54, %53 : vector<1x128xf32>
    %56 = arith.index_cast %arg0 : i32 to index
    %c5 = arith.constant 5 : index
    %57 = memref.load %arg4[%56, %c5] : memref<2x16xf32, #tpu.memory_space<smem>>
    %58 = vector.extract_strided_slice %2 {offsets = [1, 0], sizes = [1, 128], strides = [1, 1]} : vector<4x128xf32> to vector<1x128xf32>
    %59 = vector.broadcast %57 : f32 to vector<1x128xf32>
    %60 = arith.mulf %59, %58 : vector<1x128xf32>
    %61 = arith.addf %55, %60 : vector<1x128xf32>
    %62 = arith.index_cast %arg0 : i32 to index
    %c6 = arith.constant 6 : index
    %63 = memref.load %arg4[%62, %c6] : memref<2x16xf32, #tpu.memory_space<smem>>
    %64 = vector.extract_strided_slice %2 {offsets = [2, 0], sizes = [1, 128], strides = [1, 1]} : vector<4x128xf32> to vector<1x128xf32>
    %65 = vector.broadcast %63 : f32 to vector<1x128xf32>
    %66 = arith.mulf %65, %64 : vector<1x128xf32>
    %67 = arith.addf %61, %66 : vector<1x128xf32>
    %68 = arith.index_cast %arg0 : i32 to index
    %c7 = arith.constant 7 : index
    %69 = memref.load %arg4[%68, %c7] : memref<2x16xf32, #tpu.memory_space<smem>>
    %70 = vector.extract_strided_slice %2 {offsets = [3, 0], sizes = [1, 128], strides = [1, 1]} : vector<4x128xf32> to vector<1x128xf32>
    %71 = vector.broadcast %69 : f32 to vector<1x128xf32>
    %72 = arith.mulf %71, %70 : vector<1x128xf32>
    %73 = arith.addf %67, %72 : vector<1x128xf32>
    %c2_13 = arith.constant 2 : index
    %74 = memref.load %arg5[%c2_13] : memref<8xf32, #tpu.memory_space<smem>>
    %75 = vector.extract_strided_slice %5 {offsets = [0, 0], sizes = [1, 128], strides = [1, 1]} : vector<2x128xf32> to vector<1x128xf32>
    %76 = vector.broadcast %74 : f32 to vector<1x128xf32>
    %77 = arith.mulf %76, %75 : vector<1x128xf32>
    %78 = arith.addf %73, %77 : vector<1x128xf32>
    %c3_14 = arith.constant 3 : index
    %79 = memref.load %arg5[%c3_14] : memref<8xf32, #tpu.memory_space<smem>>
    %80 = vector.extract_strided_slice %5 {offsets = [1, 0], sizes = [1, 128], strides = [1, 1]} : vector<2x128xf32> to vector<1x128xf32>
    %81 = vector.broadcast %79 : f32 to vector<1x128xf32>
    %82 = arith.mulf %81, %80 : vector<1x128xf32>
    %83 = arith.addf %78, %82 : vector<1x128xf32>
    %84 = arith.truncf %83 : vector<1x128xf32> to vector<1x128xbf16>
    %c0_15 = arith.constant 0 : index
    %c1_16 = arith.constant 1 : index
    %c0_17 = arith.constant 0 : index
    %85 = vector.load %arg7[%c0_15, %c1_16, %c0_17] : memref<1x4x128xbf16, #tpu.memory_space<vmem>>, vector<1x1x128xbf16>
    %86 = vector.shape_cast %85 : vector<1x1x128xbf16> to vector<1x128xbf16>
    %87 = vector.shape_cast %84 : vector<1x128xbf16> to vector<1x1x128xbf16>
    tpu.vector_store %arg7[%c0_15, %c1_16, %c0_17], %87 {strides = array<i32>} : memref<1x4x128xbf16, #tpu.memory_space<vmem>>, vector<1x1x128xbf16>,
    %88 = arith.index_cast %arg0 : i32 to index
    %c2_18 = arith.constant 2 : index
    %89 = memref.load %arg6[%88, %c2_18] : memref<2x4xf32, #tpu.memory_space<smem>>
    %90 = arith.index_cast %arg0 : i32 to index
    %c8 = arith.constant 8 : index
    %91 = memref.load %arg4[%90, %c8] : memref<2x16xf32, #tpu.memory_space<smem>>
    %92 = vector.extract_strided_slice %2 {offsets = [0, 0], sizes = [1, 128], strides = [1, 1]} : vector<4x128xf32> to vector<1x128xf32>
    %93 = vector.broadcast %91 : f32 to vector<1x128xf32>
    %94 = arith.mulf %93, %92 : vector<1x128xf32>
    %95 = vector.broadcast %89 : f32 to vector<1x128xf32>
    %96 = arith.addf %95, %94 : vector<1x128xf32>
    %97 = arith.index_cast %arg0 : i32 to index
    %c9 = arith.constant 9 : index
    %98 = memref.load %arg4[%97, %c9] : memref<2x16xf32, #tpu.memory_space<smem>>
    %99 = vector.extract_strided_slice %2 {offsets = [1, 0], sizes = [1, 128], strides = [1, 1]} : vector<4x128xf32> to vector<1x128xf32>
    %100 = vector.broadcast %98 : f32 to vector<1x128xf32>
    %101 = arith.mulf %100, %99 : vector<1x128xf32>
    %102 = arith.addf %96, %101 : vector<1x128xf32>
    %103 = arith.index_cast %arg0 : i32 to index
    %c10 = arith.constant 10 : index
    %104 = memref.load %arg4[%103, %c10] : memref<2x16xf32, #tpu.memory_space<smem>>
    %105 = vector.extract_strided_slice %2 {offsets = [2, 0], sizes = [1, 128], strides = [1, 1]} : vector<4x128xf32> to vector<1x128xf32>
    %106 = vector.broadcast %104 : f32 to vector<1x128xf32>
    %107 = arith.mulf %106, %105 : vector<1x128xf32>
    %108 = arith.addf %102, %107 : vector<1x128xf32>
    %109 = arith.index_cast %arg0 : i32 to index
    %c11 = arith.constant 11 : index
    %110 = memref.load %arg4[%109, %c11] : memref<2x16xf32, #tpu.memory_space<smem>>
    %111 = vector.extract_strided_slice %2 {offsets = [3, 0], sizes = [1, 128], strides = [1, 1]} : vector<4x128xf32> to vector<1x128xf32>
    %112 = vector.broadcast %110 : f32 to vector<1x128xf32>
    %113 = arith.mulf %112, %111 : vector<1x128xf32>
    %114 = arith.addf %108, %113 : vector<1x128xf32>
    %c4_19 = arith.constant 4 : index
    %115 = memref.load %arg5[%c4_19] : memref<8xf32, #tpu.memory_space<smem>>
    %116 = vector.extract_strided_slice %5 {offsets = [0, 0], sizes = [1, 128], strides = [1, 1]} : vector<2x128xf32> to vector<1x128xf32>
    %117 = vector.broadcast %115 : f32 to vector<1x128xf32>
    %118 = arith.mulf %117, %116 : vector<1x128xf32>
    %119 = arith.addf %114, %118 : vector<1x128xf32>
    %c5_20 = arith.constant 5 : index
    %120 = memref.load %arg5[%c5_20] : memref<8xf32, #tpu.memory_space<smem>>
    %121 = vector.extract_strided_slice %5 {offsets = [1, 0], sizes = [1, 128], strides = [1, 1]} : vector<2x128xf32> to vector<1x128xf32>
    %122 = vector.broadcast %120 : f32 to vector<1x128xf32>
    %123 = arith.mulf %122, %121 : vector<1x128xf32>
    %124 = arith.addf %119, %123 : vector<1x128xf32>
    %125 = arith.truncf %124 : vector<1x128xf32> to vector<1x128xbf16>
    %c0_21 = arith.constant 0 : index
    %c2_22 = arith.constant 2 : index
    %c0_23 = arith.constant 0 : index
    %126 = vector.load %arg7[%c0_21, %c2_22, %c0_23] : memref<1x4x128xbf16, #tpu.memory_space<vmem>>, vector<1x1x128xbf16>
    %127 = vector.shape_cast %126 : vector<1x1x128xbf16> to vector<1x128xbf16>
    %128 = vector.shape_cast %125 : vector<1x128xbf16> to vector<1x1x128xbf16>
    tpu.vector_store %arg7[%c0_21, %c2_22, %c0_23], %128 {strides = array<i32>} : memref<1x4x128xbf16, #tpu.memory_space<vmem>>, vector<1x1x128xbf16>,
    %129 = arith.index_cast %arg0 : i32 to index
    %c3_24 = arith.constant 3 : index
    %130 = memref.load %arg6[%129, %c3_24] : memref<2x4xf32, #tpu.memory_space<smem>>
    %131 = arith.index_cast %arg0 : i32 to index
    %c12 = arith.constant 12 : index
    %132 = memref.load %arg4[%131, %c12] : memref<2x16xf32, #tpu.memory_space<smem>>
    %133 = vector.extract_strided_slice %2 {offsets = [0, 0], sizes = [1, 128], strides = [1, 1]} : vector<4x128xf32> to vector<1x128xf32>
    %134 = vector.broadcast %132 : f32 to vector<1x128xf32>
    %135 = arith.mulf %134, %133 : vector<1x128xf32>
    %136 = vector.broadcast %130 : f32 to vector<1x128xf32>
    %137 = arith.addf %136, %135 : vector<1x128xf32>
    %138 = arith.index_cast %arg0 : i32 to index
    %c13 = arith.constant 13 : index
    %139 = memref.load %arg4[%138, %c13] : memref<2x16xf32, #tpu.memory_space<smem>>
    %140 = vector.extract_strided_slice %2 {offsets = [1, 0], sizes = [1, 128], strides = [1, 1]} : vector<4x128xf32> to vector<1x128xf32>
    %141 = vector.broadcast %139 : f32 to vector<1x128xf32>
    %142 = arith.mulf %141, %140 : vector<1x128xf32>
    %143 = arith.addf %137, %142 : vector<1x128xf32>
    %144 = arith.index_cast %arg0 : i32 to index
    %c14 = arith.constant 14 : index
    %145 = memref.load %arg4[%144, %c14] : memref<2x16xf32, #tpu.memory_space<smem>>
    %146 = vector.extract_strided_slice %2 {offsets = [2, 0], sizes = [1, 128], strides = [1, 1]} : vector<4x128xf32> to vector<1x128xf32>
    %147 = vector.broadcast %145 : f32 to vector<1x128xf32>
    %148 = arith.mulf %147, %146 : vector<1x128xf32>
    %149 = arith.addf %143, %148 : vector<1x128xf32>
    %150 = arith.index_cast %arg0 : i32 to index
    %c15 = arith.constant 15 : index
    %151 = memref.load %arg4[%150, %c15] : memref<2x16xf32, #tpu.memory_space<smem>>
    %152 = vector.extract_strided_slice %2 {offsets = [3, 0], sizes = [1, 128], strides = [1, 1]} : vector<4x128xf32> to vector<1x128xf32>
    %153 = vector.broadcast %151 : f32 to vector<1x128xf32>
    %154 = arith.mulf %153, %152 : vector<1x128xf32>
    %155 = arith.addf %149, %154 : vector<1x128xf32>
    %c6_25 = arith.constant 6 : index
    %156 = memref.load %arg5[%c6_25] : memref<8xf32, #tpu.memory_space<smem>>
    %157 = vector.extract_strided_slice %5 {offsets = [0, 0], sizes = [1, 128], strides = [1, 1]} : vector<2x128xf32> to vector<1x128xf32>
    %158 = vector.broadcast %156 : f32 to vector<1x128xf32>
    %159 = arith.mulf %158, %157 : vector<1x128xf32>
    %160 = arith.addf %155, %159 : vector<1x128xf32>
    %c7_26 = arith.constant 7 : index
    %161 = memref.load %arg5[%c7_26] : memref<8xf32, #tpu.memory_space<smem>>
    %162 = vector.extract_strided_slice %5 {offsets = [1, 0], sizes = [1, 128], strides = [1, 1]} : vector<2x128xf32> to vector<1x128xf32>
    %163 = vector.broadcast %161 : f32 to vector<1x128xf32>
    %164 = arith.mulf %163, %162 : vector<1x128xf32>
    %165 = arith.addf %160, %164 : vector<1x128xf32>
    %166 = arith.truncf %165 : vector<1x128xf32> to vector<1x128xbf16>
    %c0_27 = arith.constant 0 : index
    %c3_28 = arith.constant 3 : index
    %c0_29 = arith.constant 0 : index
    %167 = vector.load %arg7[%c0_27, %c3_28, %c0_29] : memref<1x4x128xbf16, #tpu.memory_space<vmem>>, vector<1x1x128xbf16>
    %168 = vector.shape_cast %167 : vector<1x1x128xbf16> to vector<1x128xbf16>
    %169 = vector.shape_cast %166 : vector<1x128xbf16> to vector<1x1x128xbf16>
    tpu.vector_store %arg7[%c0_27, %c3_28, %c0_29], %169 {strides = array<i32>} : memref<1x4x128xbf16, #tpu.memory_space<vmem>>, vector<1x1x128xbf16>,
    return
  }
  func.func @transform_0(%arg0: i32, %arg1: i32) -> (i32, i32, i32) {
    %c0_i32 = arith.constant 0 : i32
    %c0_i32_0 = arith.constant 0 : i32
    return %arg0, %c0_i32, %arg1 : i32, i32, i32
  }
  func.func @transform_1(%arg0: i32, %arg1: i32) -> (i32, i32, i32) {
    %c0_i32 = arith.constant 0 : i32
    %c0_i32_0 = arith.constant 0 : i32
    return %arg0, %c0_i32, %arg1 : i32, i32, i32
  }
  func.func @transform_2(%arg0: i32, %arg1: i32) -> (i32, i32) {
    %c0_i32 = arith.constant 0 : i32
    %c0_i32_0 = arith.constant 0 : i32
    %c0_i32_1 = arith.constant 0 : i32
    return %c0_i32, %c0_i32_0 : i32, i32
  }
  func.func @transform_3(%arg0: i32, %arg1: i32) -> i32 {
    %c0_i32 = arith.constant 0 : i32
    %c0_i32_0 = arith.constant 0 : i32
    return %c0_i32 : i32
  }
  func.func @transform_4(%arg0: i32, %arg1: i32) -> (i32, i32) {
    %c0_i32 = arith.constant 0 : i32
    %c0_i32_0 = arith.constant 0 : i32
    %c0_i32_1 = arith.constant 0 : i32
    return %c0_i32, %c0_i32_0 : i32, i32
  }
  func.func @transform_5(%arg0: i32, %arg1: i32) -> (i32, i32, i32) {
    %c0_i32 = arith.constant 0 : i32
    %c0_i32_0 = arith.constant 0 : i32
    return %arg0, %c0_i32, %arg1 : i32, i32, i32
  }
}

</mosaic_0001>

<llo_original>
// kernel: conditional_forward.1
$region0: #{conditional_forward.1}
  #allocation0 [shape = 'u32[]', space=smem, size = 0x4, offset = 0x4, fixed_abs, tag = 'smem constant byte address 0x4 - core index']
  #allocation1 [shape = 'u32[144,128]{1,0:T(1,128)}', space=vmem, size = 0x12000, scoped, tag = 'internal scratch']
  %s0 = inlined_call_operand.vmem [shape: bf16[2,4,256], index: 0, kind: input, shape index: {}]
  %s1 = inlined_call_operand.vmem [shape: bf16[2,2,256], index: 1, kind: input, shape index: {}]
  %s2 = inlined_call_operand.vmem [shape: f32[2,16], index: 2, kind: input, shape index: {}]
  %s3 = inlined_call_operand.vmem [shape: f32[8], index: 3, kind: input, shape index: {}]
  %s4 = inlined_call_operand.vmem [shape: f32[2,4], index: 4, kind: input, shape index: {}]
  %s5 = inlined_call_operand.vmem [shape: bf16[2,4,256], index: 5, kind: output, shape index: {}]
  %s6 = sld [smem:[#allocation0]]
  $region65: #{conditional_forward.1} parent=0
    _
  %s8 = ssub.s32 1, %s6
  %s9 = scalar_select 0, %s8, %s6
  $region1: #{conditional_forward.1} parent=0
    #allocation2 [shape = 'u8[1024]{0}', space=smem, size = 0x400, scoped, tag = 'input window, operand 2, single buffered']
    #allocation3 [shape = 's32[2]{0}', space=sflag, size = 0x8, scoped, tag = 'scoped memory for conditional_forward.1']
    #allocation4 [shape = 'u8[512]{0}', space=smem, size = 0x200, scoped, tag = 'input window, operand 3, single buffered']
    #allocation5 [shape = 's32[1]{0}', space=sflag, size = 0x4, scoped, tag = 'scoped memory for conditional_forward.1']
    #allocation6 [shape = 'u8[1024]{0}', space=smem, size = 0x400, scoped, tag = 'input window, operand 4, single buffered']
    %10 = vsyncpa [#allocation3], 0
    %11 = vsyncpa [#allocation5], 0
    loop: start=0, step=1, limit=6
    $region2: #{conditional_forward.1} parent=1 // loop_pre_header
      _
    $region3: #{conditional_forward.1} parent=1 // loop_header
      %s13 = sphi 0, %s17
      %p14 = scmp.ge.s32.totalorder %s13, 6
      %s20 = sphi 0, %s32
      %s21 = sphi 0, %s28
      %s22 = sphi 0, %s20
      %s23 = sphi 0, %s21
      %s24 = sphi 0, %s22
      %s25 = sphi 0, %s23
      %s37 = sphi 0, %s39
      %s40 = sphi 0, %s37
      %s41 = sphi 0, %s40
      %s57 = sphi 0, %s41
      %s65 = sphi 0, %s67
      %s68 = sphi 0, %s65
      %s69 = sphi 0, %s68
      %s85 = sphi 0, %s69
      %s89 = sphi 0, %s89
      %s91 = sphi 0, %s89
      %s92 = sphi 0, %s91
      %s106 = sphi 0, %s92
      %s110 = sphi 0, %s110
      %s112 = sphi 0, %s110
      %s113 = sphi 0, %s112
      %s127 = sphi 0, %s113
      %s131 = sphi 0, %s131
      %s133 = sphi 0, %s131
      %s134 = sphi 0, %s133
      %s148 = sphi 0, %s134
      %s156 = sphi 0, %s158
      %s159 = sphi 0, %s156
      %s160 = sphi 0, %s159
      %s176 = sphi 0, %s160
    $region4: #{conditional_forward.1} parent=1 // loop_header_branch
      %16 = sbr.rel (%p14) target = $region8
    $region5: #{conditional_forward.1} parent=1 // loop_body
      %s18 = ssub.s32 %s13, 1
      %s19 = ssub.s32 %s13, 2
      %s26 = sadd.s32 1, %s21
      %p27 = scmp.ge.s32.totalorder %s26, 2
      %s28 = scalar_select %p27, 0, %s26
      %s29 = sadd.s32 1, %s20
      %s30 = scalar_select %p27, %s29, %s20
      %p31 = scmp.ge.s32.totalorder %s30, 2
      %s32 = scalar_select %p31, 0, %s30
      %s33 = ssub.s32 %s20, %s32
      %s34 = ssub.s32 %s21, %s28
      %s35 = sor.u32 %s33, %s34
      %p36 = scmp.eq.s32.totalorder %s35, 0
      %s38 = sadd.s32 %s37, 1
      %s39 = scalar_select %p36, %s37, %s38
      %p42 = pneg %p36
      %p43 = scmp.eq.s32.totalorder %s13, 3
      %p44 = por %p42, %p43
      %p45 = scmp.ne.s32.totalorder %s37, %s40
      %p46 = scmp.eq.s32.totalorder %s13, 0
      %p47 = por %p45, %p46
      %p48 = scmp.ne.s32.totalorder %s37, %s40
      %p49 = scmp.eq.s32.totalorder %s18, 3
      %p50 = por %p48, %p49
      %p51 = scmp.ne.s32.totalorder %s40, %s41
      %p52 = scmp.eq.s32.totalorder %s18, 0
      %p53 = por %p51, %p52
      %p54 = scmp.ne.s32.totalorder %s40, %s41
      %p55 = scmp.eq.s32.totalorder %s19, 3
      %p56 = por %p54, %p55
      %p58 = scmp.ne.s32.totalorder %s41, %s57
      %p59 = scmp.eq.s32.totalorder %s19, 0
      %p60 = por %p58, %p59
      %s61 = ssub.s32 %s20, %s32
      %s62 = ssub.s32 %s21, %s28
      %s63 = sor.u32 %s61, %s62
      %p64 = scmp.eq.s32.totalorder %s63, 0
      %s66 = sadd.s32 %s65, 1
      %s67 = scalar_select %p64, %s65, %s66
      %p70 = pneg %p64
      %p71 = scmp.eq.s32.totalorder %s13, 3
      %p72 = por %p70, %p71
      %p73 = scmp.ne.s32.totalorder %s65, %s68
      %p74 = scmp.eq.s32.totalorder %s13, 0
      %p75 = por %p73, %p74
      %p76 = scmp.ne.s32.totalorder %s65, %s68
      %p77 = scmp.eq.s32.totalorder %s18, 3
      %p78 = por %p76, %p77
      %p79 = scmp.ne.s32.totalorder %s68, %s69
      %p80 = scmp.eq.s32.totalorder %s18, 0
      %p81 = por %p79, %p80
      %p82 = scmp.ne.s32.totalorder %s68, %s69
      %p83 = scmp.eq.s32.totalorder %s19, 3
      %p84 = por %p82, %p83
      %p86 = scmp.ne.s32.totalorder %s69, %s85
      %p87 = scmp.eq.s32.totalorder %s19, 0
      %p88 = por %p86, %p87
      %s90 = sadd.s32 %s89, 1
      %p93 = scmp.eq.s32.totalorder %s13, 3
      %p94 = scmp.ne.s32.totalorder %s89, %s91
      %p95 = scmp.eq.s32.totalorder %s13, 0
      %p96 = por %p94, %p95
      %p97 = scmp.ne.s32.totalorder %s89, %s91
      %p98 = scmp.eq.s32.totalorder %s18, 3
      %p99 = por %p97, %p98
      %p100 = scmp.ne.s32.totalorder %s91, %s92
      %p101 = scmp.eq.s32.totalorder %s18, 0
      %p102 = por %p100, %p101
      %p103 = scmp.ne.s32.totalorder %s91, %s92
      %p104 = scmp.eq.s32.totalorder %s19, 3
      %p105 = por %p103, %p104
      %p107 = scmp.ne.s32.totalorder %s92, %s106
      %p108 = scmp.eq.s32.totalorder %s19, 0
      %p109 = por %p107, %p108
      %s111 = sadd.s32 %s110, 1
      %p114 = scmp.eq.s32.totalorder %s13, 3
      %p115 = scmp.ne.s32.totalorder %s110, %s112
      %p116 = scmp.eq.s32.totalorder %s13, 0
      %p117 = por %p115, %p116
      %p118 = scmp.ne.s32.totalorder %s110, %s112
      %p119 = scmp.eq.s32.totalorder %s18, 3
      %p120 = por %p118, %p119
      %p121 = scmp.ne.s32.totalorder %s112, %s113
      %p122 = scmp.eq.s32.totalorder %s18, 0
      %p123 = por %p121, %p122
      %p124 = scmp.ne.s32.totalorder %s112, %s113
      %p125 = scmp.eq.s32.totalorder %s19, 3
      %p126 = por %p124, %p125
      %p128 = scmp.ne.s32.totalorder %s113, %s127
      %p129 = scmp.eq.s32.totalorder %s19, 0
      %p130 = por %p128, %p129
      %s132 = sadd.s32 %s131, 1
      %p135 = scmp.eq.s32.totalorder %s13, 3
      %p136 = scmp.ne.s32.totalorder %s131, %s133
      %p137 = scmp.eq.s32.totalorder %s13, 0
      %p138 = por %p136, %p137
      %p139 = scmp.ne.s32.totalorder %s131, %s133
      %p140 = scmp.eq.s32.totalorder %s18, 3
      %p141 = por %p139, %p140
      %p142 = scmp.ne.s32.totalorder %s133, %s134
      %p143 = scmp.eq.s32.totalorder %s18, 0
      %p144 = por %p142, %p143
      %p145 = scmp.ne.s32.totalorder %s133, %s134
      %p146 = scmp.eq.s32.totalorder %s19, 3
      %p147 = por %p145, %p146
      %p149 = scmp.ne.s32.totalorder %s134, %s148
      %p150 = scmp.eq.s32.totalorder %s19, 0
      %p151 = por %p149, %p150
      %s152 = ssub.s32 %s20, %s32
      %s153 = ssub.s32 %s21, %s28
      %s154 = sor.u32 %s152, %s153
      %p155 = scmp.eq.s32.totalorder %s154, 0
      %s157 = sadd.s32 %s156, 1
      %s158 = scalar_select %p155, %s156, %s157
      %p161 = pneg %p155
      %p162 = scmp.eq.s32.totalorder %s13, 3
      %p163 = por %p161, %p162
      %p164 = scmp.ne.s32.totalorder %s156, %s159
      %p165 = scmp.eq.s32.totalorder %s13, 0
      %p166 = por %p164, %p165
      %p167 = scmp.ne.s32.totalorder %s156, %s159
      %p168 = scmp.eq.s32.totalorder %s18, 3
      %p169 = por %p167, %p168
      %p170 = scmp.ne.s32.totalorder %s159, %s160
      %p171 = scmp.eq.s32.totalorder %s18, 0
      %p172 = por %p170, %p171
      %p173 = scmp.ne.s32.totalorder %s159, %s160
      %p174 = scmp.eq.s32.totalorder %s19, 3
      %p175 = por %p173, %p174
      %p177 = scmp.ne.s32.totalorder %s160, %s176
      %p178 = scmp.eq.s32.totalorder %s19, 0
      %p179 = por %p177, %p178
      %p180 = scmp.le.s32.totalorder 1, %s13
      %p181 = scmp.lt.s32.totalorder %s13, 5
      %p182 = pnand %p180, %p181
      %p183 = pneg %p182
      // Predicated region
      $region9: #{conditional_forward.1} parent=5 // pred_check
        _
      $region10: #{conditional_forward.1} parent=5 // pred_check_branch
        %185 = sbr.rel (%p182) target = $region12
      $region11: #{conditional_forward.1} parent=5 // pred_region
        %s186 = ssub.s32 %s13, 1
        // Predicated region
        $region13: #{conditional_forward.1} parent=11 // pred_check
          %p187 = pneg %p102
        $region14: #{conditional_forward.1} parent=11 // pred_check_branch
          %189 = sbr.rel (%p187) target = $region16
        $region15: #{conditional_forward.1} parent=11 // pred_region
          %s191 = ssub.s32 32, 32
          %192 = vsyncadd [#allocation3], %s191
          %s194 = sshll.u32 %s2, 4
          %s195 = int_to_ptr.vmem [resolvable:$true] %s194
          %197 = dma.vmem_to_smem %s195, 32, [#allocation2], [#allocation3]
        $region16: #{conditional_forward.1} parent=11 // pred_fallthru
          _
        // Predicated region
        $region17: #{conditional_forward.1} parent=11 // pred_check
          %p198 = pneg %p123
        $region18: #{conditional_forward.1} parent=11 // pred_check_branch
          %200 = sbr.rel (%p198) target = $region20
        $region19: #{conditional_forward.1} parent=11 // pred_region
          %s202 = ssub.s32 16, 16
          %203 = vsyncadd [#allocation5], %s202
          %s205 = sshll.u32 %s3, 4
          %s206 = int_to_ptr.vmem [resolvable:$true] %s205
          %208 = dma.vmem_to_smem %s206, 16, [#allocation4], [#allocation5]
        $region20: #{conditional_forward.1} parent=11 // pred_fallthru
          _
        // Predicated region
        $region21: #{conditional_forward.1} parent=11 // pred_check
          %p209 = pneg %p144
        $region22: #{conditional_forward.1} parent=11 // pred_check_branch
          %211 = sbr.rel (%p209) target = $region24
        $region23: #{conditional_forward.1} parent=11 // pred_region
          %s213 = ssub.s32 32, 32
          %214 = vsyncadd [#allocation5], %s213
          %s216 = sshll.u32 %s4, 4
          %s217 = int_to_ptr.vmem [resolvable:$true] %s216
          %219 = dma.vmem_to_smem %s217, 32, [#allocation6], [#allocation5]
        $region24: #{conditional_forward.1} parent=11 // pred_fallthru
          _
      $region12: #{conditional_forward.1} parent=5 // pred_fallthru
        _
      %p220 = scmp.lt.s32.totalorder %s13, 4
      // Predicated region
      $region25: #{conditional_forward.1} parent=5 // pred_check
        %p221 = pneg %p220
      $region26: #{conditional_forward.1} parent=5 // pred_check_branch
        %223 = sbr.rel (%p221) target = $region28
      $region27: #{conditional_forward.1} parent=5 // pred_region
        // Predicated region
        $region29: #{conditional_forward.1} parent=27 // pred_check
          %p224 = pneg %p47
        $region30: #{conditional_forward.1} parent=27 // pred_check_branch
          %226 = sbr.rel (%p224) target = $region32
        $region31: #{conditional_forward.1} parent=27 // pred_region
          %p227 = scmp.lt.s32.totalorder %s20, 1
          %s228 = scalar_select %p227, %s20, 1
          %p229 = scmp.lt.s32.totalorder %s21, 1
          %s230 = scalar_select %p229, %s21, 1
          %s231 = smul.addr %s228, 2
          %s232 = sadd.s32 %s230, %s231
          %s233 = smul.addr %s232, 2
          %s234 = scalar_lea.vmem %s0, %s233
        $region32: #{conditional_forward.1} parent=27 // pred_fallthru
          _
        // Predicated region
        $region33: #{conditional_forward.1} parent=27 // pred_check
          %p235 = pneg %p75
        $region34: #{conditional_forward.1} parent=27 // pred_check_branch
          %237 = sbr.rel (%p235) target = $region36
        $region35: #{conditional_forward.1} parent=27 // pred_region
          %p238 = scmp.lt.s32.totalorder %s20, 1
          %s239 = scalar_select %p238, %s20, 1
          %p240 = scmp.lt.s32.totalorder %s21, 1
          %s241 = scalar_select %p240, %s21, 1
          %s242 = smul.addr %s239, 2
          %s243 = sadd.s32 %s241, %s242
          %s244 = scalar_lea.vmem %s1, %s243
        $region36: #{conditional_forward.1} parent=27 // pred_fallthru
          _
      $region28: #{conditional_forward.1} parent=5 // pred_fallthru
        _
      %p245 = scmp.le.s32.totalorder 1, %s13
      %p246 = scmp.lt.s32.totalorder %s13, 5
      %p247 = pnand %p245, %p246
      %p248 = pneg %p247
      // Predicated region
      $region37: #{conditional_forward.1} parent=5 // pred_check
        _
      $region38: #{conditional_forward.1} parent=5 // pred_check_branch
        %250 = sbr.rel (%p247) target = $region40
      $region39: #{conditional_forward.1} parent=5 // pred_region
        %s251 = ssub.s32 %s13, 1
        // Predicated region
        $region41: #{conditional_forward.1} parent=39 // pred_check
          %p252 = pneg %p102
        $region42: #{conditional_forward.1} parent=39 // pred_check_branch
          %254 = sbr.rel (%p252) target = $region44
        $region43: #{conditional_forward.1} parent=39 // pred_region
          %255 = dma.done [#allocation3], 32
        $region44: #{conditional_forward.1} parent=39 // pred_fallthru
          _
        // Predicated region
        $region45: #{conditional_forward.1} parent=39 // pred_check
          %p256 = pneg %p123
        $region46: #{conditional_forward.1} parent=39 // pred_check_branch
          %258 = sbr.rel (%p256) target = $region48
        $region47: #{conditional_forward.1} parent=39 // pred_region
          %259 = dma.done [#allocation5], 16
        $region48: #{conditional_forward.1} parent=39 // pred_fallthru
          _
        // Predicated region
        $region49: #{conditional_forward.1} parent=39 // pred_check
          %p260 = pneg %p144
        $region50: #{conditional_forward.1} parent=39 // pred_check_branch
          %262 = sbr.rel (%p260) target = $region52
        $region51: #{conditional_forward.1} parent=39 // pred_region
          %263 = dma.done [#allocation5], 32
        $region52: #{conditional_forward.1} parent=39 // pred_fallthru
          _
        %264 = sfence
        %p265 = scmp.lt.s32.totalorder %s22, 1
        %s266 = scalar_select %p265, %s22, 1
        %p267 = scmp.lt.s32.totalorder %s23, 1
        %s268 = scalar_select %p267, %s23, 1
        %s269 = smul.addr %s266, 2
        %s270 = sadd.s32 %s268, %s269
        %s271 = smul.addr %s270, 2
        %s272 = scalar_lea.vmem %s0, %s271
        %p273 = pneg %p53
        %p274 = pneg %p50
        %p275 = scmp.lt.s32.totalorder %s22, 1
        %s276 = scalar_select %p275, %s22, 1
        %p277 = scmp.lt.s32.totalorder %s23, 1
        %s278 = scalar_select %p277, %s23, 1
        %s279 = smul.addr %s276, 2
        %s280 = sadd.s32 %s278, %s279
        %s281 = scalar_lea.vmem %s1, %s280
        %p282 = pneg %p81
        %p283 = pneg %p78
        %p284 = pneg %p102
        %p285 = pneg %p99
        %p286 = pneg %p123
        %p287 = pneg %p120
        %p288 = pneg %p144
        %p289 = pneg %p141
        %p290 = pneg %p172
        %p291 = pneg %p169
        %p292 = scmp.lt.s32.totalorder %s22, 1
        %s293 = scalar_select %p292, %s22, 1
        %p294 = scmp.lt.s32.totalorder %s23, 1
        %s295 = scalar_select %p294, %s23, 1
        %s296 = smul.addr %s293, 2
        %s297 = sadd.s32 %s295, %s296
        %s298 = smul.addr %s297, 2
        %s299 = scalar_lea.vmem %s5, %s298
        %p300 = scmp.lt.s32.totalorder %s22, 1
        %s301 = scalar_select %p300, %s22, 1
        %p302 = scmp.lt.s32.totalorder %s23, 1
        %s303 = scalar_select %p302, %s23, 1
        %s304 = smul.addr %s301, 2
        %s305 = sadd.s32 %s303, %s304
        %s306 = smul.addr %s305, 2
        %s307 = scalar_lea.vmem %s0, %s306
        %p308 = scmp.lt.s32.totalorder %s22, 1
        %s309 = scalar_select %p308, %s22, 1
        %p310 = scmp.lt.s32.totalorder %s23, 1
        %s311 = scalar_select %p310, %s23, 1
        %s312 = smul.addr %s309, 2
        %s313 = sadd.s32 %s311, %s312
        %s314 = scalar_lea.vmem %s1, %s313
        %p315 = scmp.lt.s32.totalorder %s22, 1
        %s316 = scalar_select %p315, %s22, 1
        %p317 = scmp.lt.s32.totalorder %s23, 1
        %s318 = scalar_select %p317, %s23, 1
        %s319 = smul.addr %s316, 2
        %s320 = sadd.s32 %s318, %s319
        %s321 = smul.addr %s320, 2
        %s322 = scalar_lea.vmem %s5, %s321
        %v323 = vld [vmem:[%s307] sm:$0x3]
        %v324 = vunpack.c.l.bf16 %v323
        %v325 = vld [vmem:[%s314] sm:$0x1]
        %v326 = vunpack.c.l.bf16 %v325
        %s327 = smul.u32 %s22, 128
        %s328 = sld [smem:[#allocation6 + %s327]]
        %s329 = sld [smem:[#allocation2 + %s327]]
        %v330 = vstv %s329
        %v331 = vmul.f32 %v330, %v324
        %v332 = vstv %s328
        %v333 = vadd.f32 %v332, %v331
        %s334 = sadd.s32 %s327, 1
        %s335 = sld [smem:[#allocation2 + %s334]]
        %v336 = vstv %s335
        %v337 = vmul.f32 %v336, %v324
        %v339 = vrot.slane %v337, 5
        %v340 = vrot.slane %v339, 4
        %v342 = vadd.f32 %v333, %v340
        %s343 = sadd.s32 %s327, 2
        %s344 = sld [smem:[#allocation2 + %s343]]
        %v345 = vstv %s344
        %v346 = vmul.f32 %v345, %v324
        %v348 = vrot.slane %v346, 6
        %v349 = vrot.slane %v348, 4
        %v351 = vadd.f32 %v342, %v349
        %s352 = sadd.s32 %s327, 3
        %s353 = sld [smem:[#allocation2 + %s352]]
        %v354 = vstv %s353
        %v355 = vmul.f32 %v354, %v324
        %v357 = vrot.slane %v355, 7
        %v358 = vrot.slane %v357, 4
        %v360 = vadd.f32 %v351, %v358
        %s361 = sld [smem:[#allocation4]]
        %v362 = vstv %s361
        %v363 = vmul.f32 %v362, %v326
        %v364 = vadd.f32 %v360, %v363
        %s365 = sld [smem:[#allocation4 + $0x1]]
        %v366 = vstv %s365
        %v367 = vmul.f32 %v366, %v326
        %v370 = vunpack.c.l.s4 858984721
        %v371 = vunpack.c.0.s8 %v370
        %v372 = vlaneseq
        %v373 = vshrl.u32 %v372, 7
        %v374 = vsub.s32 %v371, %v373
        %v375 = vrot.slane %v367, %v374
        %v377 = vadd.f32 %v364, %v375
        %v378 = vpack.c.bf16 %v377, %v377
        %vm379 = vcmask 1040384
        %vm380 = vsmask.f32 256
        %vm381 = vmand %vm379, %vm380
        %v382 = vld [vmem:[%s322] sm:$0x1]
        %v383 = vsel %vm381, %v378, %v382
        %384 = vst [vmem:[%s322] sm:$0x1] %v383
        %s385 = sld [smem:[#allocation6 + %s334]]
        %s386 = sadd.s32 %s327, 4
        %s387 = sld [smem:[#allocation2 + %s386]]
        %v388 = vstv %s387
        %v389 = vmul.f32 %v388, %v324
        %v390 = vstv %s385
        %v391 = vadd.f32 %v390, %v389
        %s392 = sadd.s32 %s327, 5
        %s393 = sld [smem:[#allocation2 + %s392]]
        %v394 = vstv %s393
        %v395 = vmul.f32 %v394, %v324
        %v397 = vrot.slane %v395, 5
        %v398 = vrot.slane %v397, 4
        %v400 = vadd.f32 %v391, %v398
        %s401 = sadd.s32 %s327, 6
        %s402 = sld [smem:[#allocation2 + %s401]]
        %v403 = vstv %s402
        %v404 = vmul.f32 %v403, %v324
        %v406 = vrot.slane %v404, 6
        %v407 = vrot.slane %v406, 4
        %v409 = vadd.f32 %v400, %v407
        %s410 = sadd.s32 %s327, 7
        %s411 = sld [smem:[#allocation2 + %s410]]
        %v412 = vstv %s411
        %v413 = vmul.f32 %v412, %v324
        %v415 = vrot.slane %v413, 7
        %v416 = vrot.slane %v415, 4
        %v418 = vadd.f32 %v409, %v416
        %s419 = sld [smem:[#allocation4 + $0x2]]
        %v420 = vstv %s419
        %v421 = vmul.f32 %v420, %v326
        %v422 = vadd.f32 %v418, %v421
        %s423 = sld [smem:[#allocation4 + $0x3]]
        %v424 = vstv %s423
        %v425 = vmul.f32 %v424, %v326
        %v428 = vunpack.c.l.s4 858984721
        %v429 = vunpack.c.0.s8 %v428
        %v430 = vlaneseq
        %v431 = vshrl.u32 %v430, 7
        %v432 = vsub.s32 %v429, %v431
        %v433 = vrot.slane %v425, %v432
        %v435 = vadd.f32 %v422, %v433
        %v436 = vpack.c.bf16 %v435, %v435
        %v439 = vunpack.c.l.s4 1983009808
        %v440 = vunpack.c.0.s8 %v439
        %v441 = vlaneseq
        %v442 = vshrl.u32 %v441, 7
        %v443 = vsub.s32 %v440, %v442
        %v444 = vrot.slane %v436, %v443
        %v446 = vshll.u32 %v444, 16
        %vm449 = vsmask.f32 7938
        %vm450 = vmand %vm379, %vm449
        %v451 = vld [vmem:[%s322] sm:$0x1]
        %v452 = vsel %vm450, %v446, %v451
        %453 = vst [vmem:[%s322] sm:$0x1] %v452
        %s454 = sld [smem:[#allocation6 + %s343]]
        %s455 = sadd.s32 %s327, 8
        %s456 = sld [smem:[#allocation2 + %s455]]
        %v457 = vstv %s456
        %v458 = vmul.f32 %v457, %v324
        %v459 = vstv %s454
        %v460 = vadd.f32 %v459, %v458
        %s461 = sadd.s32 %s327, 9
        %s462 = sld [smem:[#allocation2 + %s461]]
        %v463 = vstv %s462
        %v464 = vmul.f32 %v463, %v324
        %v466 = vrot.slane %v464, 5
        %v467 = vrot.slane %v466, 4
        %v469 = vadd.f32 %v460, %v467
        %s470 = sadd.s32 %s327, 10
        %s471 = sld [smem:[#allocation2 + %s470]]
        %v472 = vstv %s471
        %v473 = vmul.f32 %v472, %v324
        %v475 = vrot.slane %v473, 6
        %v476 = vrot.slane %v475, 4
        %v478 = vadd.f32 %v469, %v476
        %s479 = sadd.s32 %s327, 11
        %s480 = sld [smem:[#allocation2 + %s479]]
        %v481 = vstv %s480
        %v482 = vmul.f32 %v481, %v324
        %v484 = vrot.slane %v482, 7
        %v485 = vrot.slane %v484, 4
        %v487 = vadd.f32 %v478, %v485
        %s488 = sld [smem:[#allocation4 + $0x4]]
        %v489 = vstv %s488
        %v490 = vmul.f32 %v489, %v326
        %v491 = vadd.f32 %v487, %v490
        %s492 = sld [smem:[#allocation4 + $0x5]]
        %v493 = vstv %s492
        %v494 = vmul.f32 %v493, %v326
        %v497 = vunpack.c.l.s4 858984721
        %v498 = vunpack.c.0.s8 %v497
        %v499 = vlaneseq
        %v500 = vshrl.u32 %v499, 7
        %v501 = vsub.s32 %v498, %v500
        %v502 = vrot.slane %v494, %v501
        %v504 = vadd.f32 %v491, %v502
        %v505 = vpack.c.bf16 %v504, %v504
        %v508 = vunpack.c.l.s4 1983009808
        %v509 = vunpack.c.0.s8 %v508
        %v510 = vlaneseq
        %v511 = vshrl.u32 %v510, 7
        %v512 = vsub.s32 %v509, %v511
        %v513 = vrot.slane %v505, %v512
        %v514 = vrot.slane %v513, 7
        %vm516 = vcmask 1041409
        %vm517 = vsmask.f32 1280
        %vm518 = vmand %vm516, %vm517
        %v519 = vld [vmem:[%s322] sm:$0x2]
        %v520 = vsel %vm518, %v514, %v519
        %521 = vst [vmem:[%s322] sm:$0x2] %v520
        %s522 = sld [smem:[#allocation6 + %s352]]
        %s523 = sadd.s32 %s327, 12
        %s524 = sld [smem:[#allocation2 + %s523]]
        %v525 = vstv %s524
        %v526 = vmul.f32 %v525, %v324
        %v527 = vstv %s522
        %v528 = vadd.f32 %v527, %v526
        %s529 = sadd.s32 %s327, 13
        %s530 = sld [smem:[#allocation2 + %s529]]
        %v531 = vstv %s530
        %v532 = vmul.f32 %v531, %v324
        %v534 = vrot.slane %v532, 5
        %v535 = vrot.slane %v534, 4
        %v537 = vadd.f32 %v528, %v535
        %s538 = sadd.s32 %s327, 14
        %s539 = sld [smem:[#allocation2 + %s538]]
        %v540 = vstv %s539
        %v541 = vmul.f32 %v540, %v324
        %v543 = vrot.slane %v541, 6
        %v544 = vrot.slane %v543, 4
        %v546 = vadd.f32 %v537, %v544
        %s547 = sadd.s32 %s327, 15
        %s548 = sld [smem:[#allocation2 + %s547]]
        %v549 = vstv %s548
        %v550 = vmul.f32 %v549, %v324
        %v552 = vrot.slane %v550, 7
        %v553 = vrot.slane %v552, 4
        %v555 = vadd.f32 %v546, %v553
        %s556 = sld [smem:[#allocation4 + $0x6]]
        %v557 = vstv %s556
        %v558 = vmul.f32 %v557, %v326
        %v559 = vadd.f32 %v555, %v558
        %s560 = sld [smem:[#allocation4 + $0x7]]
        %v561 = vstv %s560
        %v562 = vmul.f32 %v561, %v326
        %v565 = vunpack.c.l.s4 858984721
        %v566 = vunpack.c.0.s8 %v565
        %v567 = vlaneseq
        %v568 = vshrl.u32 %v567, 7
        %v569 = vsub.s32 %v566, %v568
        %v570 = vrot.slane %v562, %v569
        %v572 = vadd.f32 %v559, %v570
        %v573 = vpack.c.bf16 %v572, %v572
        %v576 = vunpack.c.l.s4 1983009808
        %v577 = vunpack.c.0.s8 %v576
        %v578 = vlaneseq
        %v579 = vshrl.u32 %v578, 7
        %v580 = vsub.s32 %v577, %v579
        %v581 = vrot.slane %v573, %v580
        %v583 = vshll.u32 %v581, 16
        %v585 = vrot.slane %v583, 7
        %vm587 = vsmask.f32 7942
        %vm588 = vmand %vm516, %vm587
        %v589 = vld [vmem:[%s322] sm:$0x2]
        %v590 = vsel %vm588, %v585, %v589
        %591 = vst [vmem:[%s322] sm:$0x2] %v590
        %p592 = scmp.lt.s32.totalorder %s22, 1
        %s593 = scalar_select %p592, %s22, 1
        %p594 = scmp.lt.s32.totalorder %s23, 1
        %s595 = scalar_select %p594, %s23, 1
        %s596 = smul.addr %s593, 2
        %s597 = sadd.s32 %s595, %s596
        %s598 = smul.addr %s597, 2
        %s599 = scalar_lea.vmem %s5, %s598
        // Predicated region
        $region53: #{conditional_forward.1} parent=39 // pred_check
          %p600 = pneg %p169
        $region54: #{conditional_forward.1} parent=39 // pred_check_branch
          %602 = sbr.rel (%p600) target = $region56
        $region55: #{conditional_forward.1} parent=39 // pred_region
          _
        $region56: #{conditional_forward.1} parent=39 // pred_fallthru
          _
      $region40: #{conditional_forward.1} parent=5 // pred_fallthru
        _
      %p603 = scmp.le.s32.totalorder 2, %s13
      // Predicated region
      $region57: #{conditional_forward.1} parent=5 // pred_check
        %p604 = pneg %p603
      $region58: #{conditional_forward.1} parent=5 // pred_check_branch
        %606 = sbr.rel (%p604) target = $region60
      $region59: #{conditional_forward.1} parent=5 // pred_region
        %s607 = ssub.s32 %s13, 2
        // Predicated region
        $region61: #{conditional_forward.1} parent=59 // pred_check
          %p608 = pneg %p175
        $region62: #{conditional_forward.1} parent=59 // pred_check_branch
          %610 = sbr.rel (%p608) target = $region64
        $region63: #{conditional_forward.1} parent=59 // pred_region
          %p611 = scmp.lt.s32.totalorder %s24, 1
          %s612 = scalar_select %p611, %s24, 1
          %p613 = scmp.lt.s32.totalorder %s25, 1
          %s614 = scalar_select %p613, %s25, 1
          %s615 = smul.addr %s612, 2
          %s616 = sadd.s32 %s614, %s615
          %s617 = smul.addr %s616, 2
          %s618 = scalar_lea.vmem %s5, %s617
        $region64: #{conditional_forward.1} parent=59 // pred_fallthru
          _
      $region60: #{conditional_forward.1} parent=5 // pred_fallthru
        _
    $region6: #{conditional_forward.1} parent=1 // loop_footer
      %s17 = sadd.s32 1, %s13
    $region7: #{conditional_forward.1} parent=1 // loop_footer_branch
      %12 = sbr.rel target = $region3
    $region8: #{conditional_forward.1} parent=1 // loop_exit
      _
    %619 = vsyncpa [#allocation3], 1
    %s620 = scalar_lea.sflag [#allocation3], 1
    %621 = vsyncpa %s620, 1
    %622 = vsyncpa [#allocation5], 1

</llo_original>
